<compile_context>
chip_gen: v7x
topology: tpu7x:2x2x1
jax: 0.10.0
libtpu: 0.0.40
codegen_flags: <defaults>
</compile_context>

<pallas_src>
import functools

import jax
import jax.numpy as jnp
from jax.experimental import pallas as pl
from jax.experimental.pallas import tpu as pltpu

EMBED_DIM = 64
NUM_HEADS = 4
HEAD_DIM = EMBED_DIM // NUM_HEADS
SCALE = HEAD_DIM ** (-0.5)


def mhsa_kernel(x_ref, wqkv_ref, bqkv_ref, wout_ref, bout_ref, o_ref,
                *, bt, n, pack, compute_dtype):
    c, h, d = EMBED_DIM, NUM_HEADS, HEAD_DIM
    rows = bt * n
    cdt = compute_dtype

    def to_mxu(a):
        # MXU operands optionally in bf16; accumulation stays f32.
        return a if cdt is None else a.astype(cdt)

    # ---- load: un-pack the lane-dense slab into (rows, C) token rows --------
    if pack == 1:
        x = x_ref[...]                                       # (rows, C)
    else:
        # Packed row j holds token 2t in lanes [0:C) and token 2t+1 in [C:2C).
        xp = x_ref[...]                                      # (rows//2, 2C)
        ev = xp[:, :c].reshape(bt, n // 2, c)                # tokens 0,2,4,...
        od = xp[:, c:].reshape(bt, n // 2, c)                # tokens 1,3,5,...
        # Work in even-then-odd token order inside each batch element.  This is
        # a fixed permutation; attention is permutation-equivariant and the
        # store below uses the same order, so the result is unchanged.
        x = jnp.concatenate([ev, od], axis=1).reshape(rows, c)

    # ---- QKV projection: one (rows, C) @ (C, 3C) MXU matmul -----------------
    # (scale for Q is already folded into W_qkv / b_qkv by the wrapper)
    qkv = jnp.dot(to_mxu(x), wqkv_ref[...],
                  preferred_element_type=jnp.float32) + bqkv_ref[...]
    qkv = to_mxu(qkv)                                        # single cast

    # ---- head-batched attention: heads folded into the leading batch dim ----
    # Column layout matches the PyTorch reshape (N, 3, H, D):
    # [0:C) = Q, [C:2C) = K, [2C:3C) = V, each with H contiguous blocks of D.
    def split_heads(col0):
        return jnp.concatenate(
            [qkv[:, col0 + hi * d: col0 + (hi + 1) * d].reshape(bt, n, d)
             for hi in range(h)],
            axis=0)                                          # (h*bt, n, d)

    q = split_heads(0)
    k = split_heads(c)
    v = split_heads(2 * c)

    # One batched score einsum / softmax / PV einsum for all heads.
    s = jnp.einsum("gnd,gmd->gnm", q, k,
                   preferred_element_type=jnp.float32)       # (h*bt, n, n)
    s = s - jnp.max(s, axis=-1, keepdims=True)               # f32 softmax
    p = jnp.exp(s)
    denom = jnp.sum(p, axis=-1, keepdims=True)
    # approx=True (EUP slot) on the bf16 perf path; exact on the f32 parity path.
    p = p * pl.reciprocal(denom, approx=cdt is not None)

    o_g = jnp.einsum("gnm,gmd->gnd", to_mxu(p), v,
                     preferred_element_type=jnp.float32)     # (h*bt, n, d)

    # ---- merge heads back into lanes, single K=C output projection ----------
    o_all = jnp.concatenate(
        [o_g[hi * bt:(hi + 1) * bt].reshape(rows, d) for hi in range(h)],
        axis=-1)                                             # (rows, C)
    out = jnp.dot(to_mxu(o_all), wout_ref[...],
                  preferred_element_type=jnp.float32) + bout_ref[...]

    # ---- store: re-pack into the lane-dense layout ---------------------------
    if pack == 1:
        o_ref[...] = out.astype(o_ref.dtype)
    else:
        o3 = out.reshape(bt, n, c)
        ev_o = o3[:, :n // 2, :].reshape(rows // 2, c)
        od_o = o3[:, n // 2:, :].reshape(rows // 2, c)
        o_ref[...] = jnp.concatenate([ev_o, od_o], axis=-1).astype(o_ref.dtype)


def _pick_batch_tile(B, N, pack, target_rows=1024):
    """Pick how many whole batch elements each grid step processes."""
    divisors = [bt for bt in range(1, B + 1) if B % bt == 0]

    def ok(bt):
        rows = bt * N
        if rows % pack:
            return False
        pr = rows // pack
        # HBM-facing row blocks must be sublane aligned, or span the full array.
        return (pr % 8 == 0) or (bt == B)

    valid = [bt for bt in divisors if ok(bt)]           # bt == B is always valid
    # Prefer >= 2 grid steps when possible (v7x has 2 TensorCores to shard over).
    multi = [bt for bt in valid if B // bt >= 2]
    pool = multi if multi else valid
    # Largest slab that stays within ~target_rows rows; else the smallest valid.
    fitting = [bt for bt in pool if bt * N <= target_rows]
    return max(fitting) if fitting else min(pool)


def multi_head_self_attention(x, w_qkv, b_qkv, w_out, b_out,
                              compute_dtype=jnp.bfloat16):
    B, N, C = x.shape
    assert C == EMBED_DIM, "kernel is specialized to embed_dim=64"

    # Fold the attention scale into the Q projection (weights are tiny; SCALE is
    # a power of two so this is exact even after the bf16 cast).
    q_scale = jnp.concatenate([jnp.full((C,), SCALE, w_qkv.dtype),
                               jnp.ones((2 * C,), w_qkv.dtype)])
    w_qkv = w_qkv * q_scale[None, :]
    b_qkv = b_qkv * q_scale

    cdt = compute_dtype
    w_qkv_k = w_qkv if cdt is None else w_qkv.astype(cdt)   # halve weight DMA
    w_out_k = w_out if cdt is None else w_out.astype(cdt)
    b_qkv2 = b_qkv.reshape(1, 3 * C).astype(jnp.float32)    # added to f32 acc
    b_out2 = b_out.reshape(1, C).astype(jnp.float32)

    # Lane-dense I/O (two tokens per 128-lane row) whenever the even/odd halves
    # stay sublane-aligned inside the kernel; otherwise fall back to (R, C).
    pack = 2 if (C == 64 and N % 16 == 0) else 1

    bt = _pick_batch_tile(B, N, pack, target_rows=1024)
    rows = bt * N
    lanes = pack * C
    pr = rows // pack

    x2d = x.reshape(B * N // pack, lanes)

    kern = functools.partial(mhsa_kernel, bt=bt, n=N, pack=pack,
                             compute_dtype=cdt)

    out2d = pl.pallas_call(
        kern,
        out_shape=jax.ShapeDtypeStruct((B * N // pack, lanes), x.dtype),
        grid_spec=pltpu.PrefetchScalarGridSpec(
            num_scalar_prefetch=0,
            grid=(B // bt,),
            in_specs=[
                pl.BlockSpec((pr, lanes), lambda i: (i, 0)),      # x slab
                pl.BlockSpec((C, 3 * C), lambda i: (0, 0)),       # W_qkv
                pl.BlockSpec((1, 3 * C), lambda i: (0, 0)),       # b_qkv
                pl.BlockSpec((C, C), lambda i: (0, 0)),           # W_out
                pl.BlockSpec((1, C), lambda i: (0, 0)),           # b_out
            ],
            out_specs=pl.BlockSpec((pr, lanes), lambda i: (i, 0)),
        ),
        compiler_params=pltpu.CompilerParams(
            # Row-slab axis is independent -> megacore / 2-TC split on v7x.
            dimension_semantics=("parallel",)),
    )(x2d, w_qkv_k, b_qkv2, w_out_k, b_out2)

    return out2d.reshape(B, N, C)


def reference(x, w_qkv, b_qkv, w_out, b_out):
    B, N, C = x.shape
    qkv = x @ w_qkv + b_qkv                                   # (B, N, 3C)
    qkv = qkv.reshape(B, N, 3, NUM_HEADS, HEAD_DIM)
    qkv = jnp.transpose(qkv, (2, 0, 3, 1, 4))                 # (3, B, H, N, D)
    q, k, v = qkv[0], qkv[1], qkv[2]
    attn = jnp.einsum("bhnd,bhmd->bhnm", q, k) * SCALE
    attn = jax.nn.softmax(attn, axis=-1)
    out = jnp.einsum("bhnm,bhmd->bhnd", attn, v)
    out = jnp.transpose(out, (0, 2, 1, 3)).reshape(B, N, C)
    return out @ w_out + b_out


if __name__ == "__main__":
    key = jax.random.PRNGKey(0)
    kx, k1, k2, k3, k4 = jax.random.split(key, 5)

    B, N, C = 2, 8, EMBED_DIM
    x = jax.random.normal(kx, (B, N, C), dtype=jnp.float32)

    # Deterministic synthetic parameters (nn.Linear shapes, stored as (in, out)).
    w_qkv = jax.random.normal(k1, (C, 3 * C), dtype=jnp.float32) * 0.05
    b_qkv = jax.random.normal(k2, (3 * C,), dtype=jnp.float32) * 0.05
    w_out = jax.random.normal(k3, (C, C), dtype=jnp.float32) * 0.05
    b_out = jax.random.normal(k4, (C,), dtype=jnp.float32) * 0.05

    y_ref = reference(x, w_qkv, b_qkv, w_out, b_out)

    # Default (perf) path: bf16 MXU operands, f32 accumulation + f32 softmax.
    y = multi_head_self_attention(x, w_qkv, b_qkv, w_out, b_out)
    y = jax.block_until_ready(y)
    assert y.shape == (B, N, C)
    assert jnp.allclose(y, y_ref, atol=2e-2, rtol=2e-2), "bf16 path mismatch vs reference"

    # Full-f32 parity path (exact reciprocal).
    y32 = multi_head_self_attention(x, w_qkv, b_qkv, w_out, b_out,
                                    compute_dtype=None)
    y32 = jax.block_until_ready(y32)
    assert jnp.allclose(y32, y_ref, atol=2e-3, rtol=2e-3), "f32 path mismatch vs reference"

    print("KERNEL_OK")
</pallas_src>

<mosaic_0001>
module attributes {stable_mosaic.version = 11 : i64} {
  func.func @mhsa_kernel(%arg0: i32, %arg1: memref<8x64xf32, #tpu.memory_space<vmem>>, %arg2: memref<64x192xbf16, #tpu.memory_space<vmem>>, %arg3: memref<1x192xf32, #tpu.memory_space<vmem>>, %arg4: memref<64x64xbf16, #tpu.memory_space<vmem>>, %arg5: memref<1x64xf32, #tpu.memory_space<vmem>>, %arg6: memref<8x64xf32, #tpu.memory_space<vmem>>) attributes {dimension_semantics = [#tpu.dimension_semantics<parallel>], iteration_bounds = array<i64: 2>, scalar_prefetch = 0 : i64, scratch_operands = 0 : i64, tpu.core_type = #tpu.core_type<tc>, window_params = [{transform_indices = @transform_0, window_bounds = array<i64: 8, 64>}, {pipeline_mode = #tpu.pipeline_mode<synchronous>, transform_indices = @transform_1, window_bounds = array<i64: 64, 192>}, {pipeline_mode = #tpu.pipeline_mode<synchronous>, transform_indices = @transform_2, window_bounds = array<i64: 1, 192>}, {pipeline_mode = #tpu.pipeline_mode<synchronous>, transform_indices = @transform_3, window_bounds = array<i64: 64, 64>}, {pipeline_mode = #tpu.pipeline_mode<synchronous>, transform_indices = @transform_4, window_bounds = array<i64: 1, 64>}, {transform_indices = @transform_5, window_bounds = array<i64: 8, 64>}]} {
    %c0 = arith.constant 0 : index
    %c0_0 = arith.constant 0 : index
    %0 = vector.load %arg1[%c0, %c0_0] : memref<8x64xf32, #tpu.memory_space<vmem>>, vector<8x64xf32>
    %1 = arith.truncf %0 : vector<8x64xf32> to vector<8x64xbf16>
    %c0_1 = arith.constant 0 : index
    %c0_2 = arith.constant 0 : index
    %2 = vector.load %arg2[%c0_1, %c0_2] : memref<64x192xbf16, #tpu.memory_space<vmem>>, vector<64x192xbf16>
    %cst = arith.constant dense<0.000000e+00> : vector<8x192xf32>
    %3 = tpu.matmul %1, %2, %cst {dimension_numbers = #tpu.dot_dimension_numbers<[1], [0], [0], [1], [0, 0, 1, 1], [], []>} : vector<8x64xbf16>, vector<64x192xbf16>, vector<8x192xf32> -> vector<8x192xf32>
    %c0_3 = arith.constant 0 : index
    %c0_4 = arith.constant 0 : index
    %4 = vector.load %arg3[%c0_3, %c0_4] : memref<1x192xf32, #tpu.memory_space<vmem>>, vector<1x192xf32>
    %5 = vector.broadcast %4 : vector<1x192xf32> to vector<8x192xf32>
    %6 = arith.addf %3, %5 : vector<8x192xf32>
    %7 = arith.truncf %6 : vector<8x192xf32> to vector<8x192xbf16>
    %8 = vector.extract_strided_slice %7 {offsets = [0, 0], sizes = [8, 16], strides = [1, 1]} : vector<8x192xbf16> to vector<8x16xbf16>
    %9 = vector.shape_cast %8 : vector<8x16xbf16> to vector<1x8x16xbf16>
    %10 = vector.extract_strided_slice %7 {offsets = [0, 16], sizes = [8, 16], strides = [1, 1]} : vector<8x192xbf16> to vector<8x16xbf16>
    %11 = vector.shape_cast %10 : vector<8x16xbf16> to vector<1x8x16xbf16>
    %12 = vector.extract_strided_slice %7 {offsets = [0, 32], sizes = [8, 16], strides = [1, 1]} : vector<8x192xbf16> to vector<8x16xbf16>
    %13 = vector.shape_cast %12 : vector<8x16xbf16> to vector<1x8x16xbf16>
    %14 = vector.extract_strided_slice %7 {offsets = [0, 48], sizes = [8, 16], strides = [1, 1]} : vector<8x192xbf16> to vector<8x16xbf16>
    %15 = vector.shape_cast %14 : vector<8x16xbf16> to vector<1x8x16xbf16>
    %16 = tpu.concatenate %9, %11, %13, %15 in 0 : vector<1x8x16xbf16>, vector<1x8x16xbf16>, vector<1x8x16xbf16>, vector<1x8x16xbf16> -> vector<4x8x16xbf16>
    %17 = vector.extract_strided_slice %7 {offsets = [0, 64], sizes = [8, 16], strides = [1, 1]} : vector<8x192xbf16> to vector<8x16xbf16>
    %18 = vector.shape_cast %17 : vector<8x16xbf16> to vector<1x8x16xbf16>
    %19 = vector.extract_strided_slice %7 {offsets = [0, 80], sizes = [8, 16], strides = [1, 1]} : vector<8x192xbf16> to vector<8x16xbf16>
    %20 = vector.shape_cast %19 : vector<8x16xbf16> to vector<1x8x16xbf16>
    %21 = vector.extract_strided_slice %7 {offsets = [0, 96], sizes = [8, 16], strides = [1, 1]} : vector<8x192xbf16> to vector<8x16xbf16>
    %22 = vector.shape_cast %21 : vector<8x16xbf16> to vector<1x8x16xbf16>
    %23 = vector.extract_strided_slice %7 {offsets = [0, 112], sizes = [8, 16], strides = [1, 1]} : vector<8x192xbf16> to vector<8x16xbf16>
    %24 = vector.shape_cast %23 : vector<8x16xbf16> to vector<1x8x16xbf16>
    %25 = tpu.concatenate %18, %20, %22, %24 in 0 : vector<1x8x16xbf16>, vector<1x8x16xbf16>, vector<1x8x16xbf16>, vector<1x8x16xbf16> -> vector<4x8x16xbf16>
    %26 = vector.extract_strided_slice %7 {offsets = [0, 128], sizes = [8, 16], strides = [1, 1]} : vector<8x192xbf16> to vector<8x16xbf16>
    %27 = vector.shape_cast %26 : vector<8x16xbf16> to vector<1x8x16xbf16>
    %28 = vector.extract_strided_slice %7 {offsets = [0, 144], sizes = [8, 16], strides = [1, 1]} : vector<8x192xbf16> to vector<8x16xbf16>
    %29 = vector.shape_cast %28 : vector<8x16xbf16> to vector<1x8x16xbf16>
    %30 = vector.extract_strided_slice %7 {offsets = [0, 160], sizes = [8, 16], strides = [1, 1]} : vector<8x192xbf16> to vector<8x16xbf16>
    %31 = vector.shape_cast %30 : vector<8x16xbf16> to vector<1x8x16xbf16>
    %32 = vector.extract_strided_slice %7 {offsets = [0, 176], sizes = [8, 16], strides = [1, 1]} : vector<8x192xbf16> to vector<8x16xbf16>
    %33 = vector.shape_cast %32 : vector<8x16xbf16> to vector<1x8x16xbf16>
    %34 = tpu.concatenate %27, %29, %31, %33 in 0 : vector<1x8x16xbf16>, vector<1x8x16xbf16>, vector<1x8x16xbf16>, vector<1x8x16xbf16> -> vector<4x8x16xbf16>
    "tpu.trace_start"() <{level = 10 : i32, message = "gnd,gmd->gnm"}> : () -> ()
    %cst_5 = arith.constant dense<0.000000e+00> : vector<4x8x8xf32>
    %35 = tpu.matmul %16, %25, %cst_5 {dimension_numbers = #tpu.dot_dimension_numbers<[2], [2], [1], [1], [0, 0, 0, 1, 1, 1], [0], [0]>} : vector<4x8x16xbf16>, vector<4x8x16xbf16>, vector<4x8x8xf32> -> vector<4x8x8xf32>
    "tpu.trace_stop"() : () -> ()
    %cst_6 = arith.constant dense<0xFF800000> : vector<4x8xf32>
    %36 = vector.multi_reduction <maximumf>, %35, %cst_6 [2] : vector<4x8x8xf32> to vector<4x8xf32>
    %37 = vector.shape_cast %36 : vector<4x8xf32> to vector<4x8x1xf32>
    %38 = vector.broadcast %37 : vector<4x8x1xf32> to vector<4x8x8xf32>
    %39 = arith.subf %35, %38 : vector<4x8x8xf32>
    %40 = math.exp %39 : vector<4x8x8xf32>
    %cst_7 = arith.constant dense<0.000000e+00> : vector<4x8xf32>
    %41 = vector.multi_reduction <add>, %40, %cst_7 [2] : vector<4x8x8xf32> to vector<4x8xf32>
    %42 = vector.shape_cast %41 : vector<4x8xf32> to vector<4x8x1xf32>
    %43 = tpu.reciprocal %42 {approx = true} : vector<4x8x1xf32> -> vector<4x8x1xf32>
    %44 = vector.broadcast %43 : vector<4x8x1xf32> to vector<4x8x8xf32>
    %45 = arith.mulf %40, %44 : vector<4x8x8xf32>
    %46 = arith.truncf %45 : vector<4x8x8xf32> to vector<4x8x8xbf16>
    "tpu.trace_start"() <{level = 10 : i32, message = "gnm,gmd->gnd"}> : () -> ()
    %cst_8 = arith.constant dense<0.000000e+00> : vector<4x8x16xf32>
    %47 = tpu.matmul %46, %34, %cst_8 {dimension_numbers = #tpu.dot_dimension_numbers<[2], [1], [1], [2], [0, 0, 0, 1, 1, 2], [0], [0]>} : vector<4x8x8xbf16>, vector<4x8x16xbf16>, vector<4x8x16xf32> -> vector<4x8x16xf32>
    "tpu.trace_stop"() : () -> ()
    %48 = vector.extract_strided_slice %47 {offsets = [0, 0, 0], sizes = [1, 8, 16], strides = [1, 1, 1]} : vector<4x8x16xf32> to vector<1x8x16xf32>
    %49 = vector.shape_cast %48 : vector<1x8x16xf32> to vector<8x16xf32>
    %50 = vector.extract_strided_slice %47 {offsets = [1, 0, 0], sizes = [1, 8, 16], strides = [1, 1, 1]} : vector<4x8x16xf32> to vector<1x8x16xf32>
    %51 = vector.shape_cast %50 : vector<1x8x16xf32> to vector<8x16xf32>
    %52 = vector.extract_strided_slice %47 {offsets = [2, 0, 0], sizes = [1, 8, 16], strides = [1, 1, 1]} : vector<4x8x16xf32> to vector<1x8x16xf32>
    %53 = vector.shape_cast %52 : vector<1x8x16xf32> to vector<8x16xf32>
    %54 = vector.extract_strided_slice %47 {offsets = [3, 0, 0], sizes = [1, 8, 16], strides = [1, 1, 1]} : vector<4x8x16xf32> to vector<1x8x16xf32>
    %55 = vector.shape_cast %54 : vector<1x8x16xf32> to vector<8x16xf32>
    %56 = tpu.concatenate %49, %51, %53, %55 in 1 : vector<8x16xf32>, vector<8x16xf32>, vector<8x16xf32>, vector<8x16xf32> -> vector<8x64xf32>
    %57 = arith.truncf %56 : vector<8x64xf32> to vector<8x64xbf16>
    %c0_9 = arith.constant 0 : index
    %c0_10 = arith.constant 0 : index
    %58 = vector.load %arg4[%c0_9, %c0_10] : memref<64x64xbf16, #tpu.memory_space<vmem>>, vector<64x64xbf16>
    %cst_11 = arith.constant dense<0.000000e+00> : vector<8x64xf32>
    %59 = tpu.matmul %57, %58, %cst_11 {dimension_numbers = #tpu.dot_dimension_numbers<[1], [0], [0], [1], [0, 0, 1, 1], [], []>} : vector<8x64xbf16>, vector<64x64xbf16>, vector<8x64xf32> -> vector<8x64xf32>
    %c0_12 = arith.constant 0 : index
    %c0_13 = arith.constant 0 : index
    %60 = vector.load %arg5[%c0_12, %c0_13] : memref<1x64xf32, #tpu.memory_space<vmem>>, vector<1x64xf32>
    %61 = vector.broadcast %60 : vector<1x64xf32> to vector<8x64xf32>
    %62 = arith.addf %59, %61 : vector<8x64xf32>
    %c0_14 = arith.constant 0 : index
    %c0_15 = arith.constant 0 : index
    %63 = vector.load %arg6[%c0_14, %c0_15] : memref<8x64xf32, #tpu.memory_space<vmem>>, vector<8x64xf32>
    tpu.vector_store %arg6[%c0_14, %c0_15], %62 {strides = array<i32>} : memref<8x64xf32, #tpu.memory_space<vmem>>, vector<8x64xf32>,
    return
  }
  func.func @transform_0(%arg0: i32) -> (i32, i32) {
    %c0_i32 = arith.constant 0 : i32
    %c0_i32_0 = arith.constant 0 : i32
    return %arg0, %c0_i32 : i32, i32
  }
  func.func @transform_1(%arg0: i32) -> (i32, i32) {
    %c0_i32 = arith.constant 0 : i32
    %c0_i32_0 = arith.constant 0 : i32
    %c0_i32_1 = arith.constant 0 : i32
    return %c0_i32, %c0_i32_0 : i32, i32
  }
  func.func @transform_2(%arg0: i32) -> (i32, i32) {
    %c0_i32 = arith.constant 0 : i32
    %c0_i32_0 = arith.constant 0 : i32
    %c0_i32_1 = arith.constant 0 : i32
    return %c0_i32, %c0_i32_0 : i32, i32
  }
  func.func @transform_3(%arg0: i32) -> (i32, i32) {
    %c0_i32 = arith.constant 0 : i32
    %c0_i32_0 = arith.constant 0 : i32
    %c0_i32_1 = arith.constant 0 : i32
    return %c0_i32, %c0_i32_0 : i32, i32
  }
  func.func @transform_4(%arg0: i32) -> (i32, i32) {
    %c0_i32 = arith.constant 0 : i32
    %c0_i32_0 = arith.constant 0 : i32
    %c0_i32_1 = arith.constant 0 : i32
    return %c0_i32, %c0_i32_0 : i32, i32
  }
  func.func @transform_5(%arg0: i32) -> (i32, i32) {
    %c0_i32 = arith.constant 0 : i32
    %c0_i32_0 = arith.constant 0 : i32
    return %arg0, %c0_i32 : i32, i32
  }
}

</mosaic_0001>

<llo_original>
// kernel: tpu_custom_call.1
$region0: #{tpu_custom_call.1}
  #allocation0 [shape = 'u32[]', space=smem, size = 0x4, offset = 0x4, fixed_abs, tag = 'smem constant byte address 0x4 - core index']
  #allocation1 [shape = 'u32[144,128]{1,0:T(1,128)}', space=vmem, size = 0x12000, scoped, tag = 'internal scratch']
  %s0 = inlined_call_operand.hbm [shape: f32[16,64], index: 0, kind: input, shape index: {}]
  %s1 = inlined_call_operand.hbm [shape: bf16[64,192], index: 1, kind: input, shape index: {}]
  %s2 = inlined_call_operand.vmem [shape: f32[1,192], index: 2, kind: input, shape index: {}]
  %s3 = inlined_call_operand.hbm [shape: bf16[64,64], index: 3, kind: input, shape index: {}]
  %s4 = inlined_call_operand.vmem [shape: f32[1,64], index: 4, kind: input, shape index: {}]
  %s5 = inlined_call_operand.hbm [shape: f32[16,64], index: 5, kind: output, shape index: {}]
  %s6 = sld [smem:[#allocation0]]
  $region65: #{tpu_custom_call.1} parent=0
    _
  %s8 = ssub.s32 1, %s6
  %s9 = scalar_select 0, %s8, %s6
  $region1: #{tpu_custom_call.1} parent=0
    #allocation2 [shape = 'u8[8192]{0}', space=vmem, size = 0x2000, scoped, tag = 'input window, operand 0']
    #allocation3 [shape = 's32[2]{0}', space=sflag, size = 0x8, scoped, tag = 'scoped memory for tpu_custom_call.1']
    #allocation4 [shape = 's32[2]{0}', space=sflag, size = 0x8, scoped, tag = 'scoped memory for tpu_custom_call.1']
    #allocation5 [shape = 'u8[32768]{0}', space=vmem, size = 0x8000, scoped, tag = 'input window, operand 1, single buffered']
    #allocation6 [shape = 's32[1]{0}', space=sflag, size = 0x4, scoped, tag = 'scoped memory for tpu_custom_call.1']
    #allocation7 [shape = 'u8[16384]{0}', space=vmem, size = 0x4000, scoped, tag = 'input window, operand 3, single buffered']
    #allocation8 [shape = 'u8[8192]{0}', space=vmem, size = 0x2000, scoped, tag = 'output window, operand 0']
    %10 = vsyncpa [#allocation3], 0
    %s11 = scalar_lea.sflag [#allocation3], 1
    %12 = vsyncpa %s11, 0
    %13 = vsyncpa [#allocation6], 0
    %14 = vsyncpa [#allocation4], 0
    %s15 = scalar_lea.sflag [#allocation4], 1
    %16 = vsyncpa %s15, 0
    loop: start=0, step=1, limit=4
    $region2: #{tpu_custom_call.1} parent=1 // loop_pre_header
      _
    $region3: #{tpu_custom_call.1} parent=1 // loop_header
      %s18 = sphi 0, %s22
      %p19 = scmp.ge.s32.totalorder %s18, 4
      %s28 = sphi 0, %s30
      %s31 = sphi 0, %s28
      %s32 = sphi 0, %s31
      %s48 = sphi 0, %s32
      %s52 = sphi 0, %s52
      %s54 = sphi 0, %s52
      %s55 = sphi 0, %s54
      %s69 = sphi 0, %s55
      %s73 = sphi 0, %s73
      %s75 = sphi 0, %s73
      %s76 = sphi 0, %s75
      %s90 = sphi 0, %s76
      %s94 = sphi 0, %s94
      %s96 = sphi 0, %s94
      %s97 = sphi 0, %s96
      %s111 = sphi 0, %s97
      %s115 = sphi 0, %s115
      %s117 = sphi 0, %s115
      %s118 = sphi 0, %s117
      %s132 = sphi 0, %s118
      %s138 = sphi 0, %s140
      %s141 = sphi 0, %s138
      %s142 = sphi 0, %s141
      %s158 = sphi 0, %s142
    $region4: #{tpu_custom_call.1} parent=1 // loop_header_branch
      %21 = sbr.rel (%p19) target = $region8
    $region5: #{tpu_custom_call.1} parent=1 // loop_body
      %s23 = ssub.s32 %s18, 1
      %s24 = ssub.s32 %s18, 2
      %s25 = sadd.s32 %s18, 1
      %s26 = ssub.s32 %s18, %s25
      %p27 = scmp.eq.s32.totalorder %s26, 0
      %s29 = sadd.s32 %s28, 1
      %s30 = scalar_select %p27, %s28, %s29
      %p33 = pneg %p27
      %p34 = scmp.eq.s32.totalorder %s18, 1
      %p35 = por %p33, %p34
      %p36 = scmp.ne.s32.totalorder %s28, %s31
      %p37 = scmp.eq.s32.totalorder %s18, 0
      %p38 = por %p36, %p37
      %p39 = scmp.ne.s32.totalorder %s28, %s31
      %p40 = scmp.eq.s32.totalorder %s23, 1
      %p41 = por %p39, %p40
      %p42 = scmp.ne.s32.totalorder %s31, %s32
      %p43 = scmp.eq.s32.totalorder %s23, 0
      %p44 = por %p42, %p43
      %p45 = scmp.ne.s32.totalorder %s31, %s32
      %p46 = scmp.eq.s32.totalorder %s24, 1
      %p47 = por %p45, %p46
      %p49 = scmp.ne.s32.totalorder %s32, %s48
      %p50 = scmp.eq.s32.totalorder %s24, 0
      %p51 = por %p49, %p50
      %s53 = sadd.s32 %s52, 1
      %p56 = scmp.eq.s32.totalorder %s18, 1
      %p57 = scmp.ne.s32.totalorder %s52, %s54
      %p58 = scmp.eq.s32.totalorder %s18, 0
      %p59 = por %p57, %p58
      %p60 = scmp.ne.s32.totalorder %s52, %s54
      %p61 = scmp.eq.s32.totalorder %s23, 1
      %p62 = por %p60, %p61
      %p63 = scmp.ne.s32.totalorder %s54, %s55
      %p64 = scmp.eq.s32.totalorder %s23, 0
      %p65 = por %p63, %p64
      %p66 = scmp.ne.s32.totalorder %s54, %s55
      %p67 = scmp.eq.s32.totalorder %s24, 1
      %p68 = por %p66, %p67
      %p70 = scmp.ne.s32.totalorder %s55, %s69
      %p71 = scmp.eq.s32.totalorder %s24, 0
      %p72 = por %p70, %p71
      %s74 = sadd.s32 %s73, 1
      %p77 = scmp.eq.s32.totalorder %s18, 1
      %p78 = scmp.ne.s32.totalorder %s73, %s75
      %p79 = scmp.eq.s32.totalorder %s18, 0
      %p80 = por %p78, %p79
      %p81 = scmp.ne.s32.totalorder %s73, %s75
      %p82 = scmp.eq.s32.totalorder %s23, 1
      %p83 = por %p81, %p82
      %p84 = scmp.ne.s32.totalorder %s75, %s76
      %p85 = scmp.eq.s32.totalorder %s23, 0
      %p86 = por %p84, %p85
      %p87 = scmp.ne.s32.totalorder %s75, %s76
      %p88 = scmp.eq.s32.totalorder %s24, 1
      %p89 = por %p87, %p88
      %p91 = scmp.ne.s32.totalorder %s76, %s90
      %p92 = scmp.eq.s32.totalorder %s24, 0
      %p93 = por %p91, %p92
      %s95 = sadd.s32 %s94, 1
      %p98 = scmp.eq.s32.totalorder %s18, 1
      %p99 = scmp.ne.s32.totalorder %s94, %s96
      %p100 = scmp.eq.s32.totalorder %s18, 0
      %p101 = por %p99, %p100
      %p102 = scmp.ne.s32.totalorder %s94, %s96
      %p103 = scmp.eq.s32.totalorder %s23, 1
      %p104 = por %p102, %p103
      %p105 = scmp.ne.s32.totalorder %s96, %s97
      %p106 = scmp.eq.s32.totalorder %s23, 0
      %p107 = por %p105, %p106
      %p108 = scmp.ne.s32.totalorder %s96, %s97
      %p109 = scmp.eq.s32.totalorder %s24, 1
      %p110 = por %p108, %p109
      %p112 = scmp.ne.s32.totalorder %s97, %s111
      %p113 = scmp.eq.s32.totalorder %s24, 0
      %p114 = por %p112, %p113
      %s116 = sadd.s32 %s115, 1
      %p119 = scmp.eq.s32.totalorder %s18, 1
      %p120 = scmp.ne.s32.totalorder %s115, %s117
      %p121 = scmp.eq.s32.totalorder %s18, 0
      %p122 = por %p120, %p121
      %p123 = scmp.ne.s32.totalorder %s115, %s117
      %p124 = scmp.eq.s32.totalorder %s23, 1
      %p125 = por %p123, %p124
      %p126 = scmp.ne.s32.totalorder %s117, %s118
      %p127 = scmp.eq.s32.totalorder %s23, 0
      %p128 = por %p126, %p127
      %p129 = scmp.ne.s32.totalorder %s117, %s118
      %p130 = scmp.eq.s32.totalorder %s24, 1
      %p131 = por %p129, %p130
      %p133 = scmp.ne.s32.totalorder %s118, %s132
      %p134 = scmp.eq.s32.totalorder %s24, 0
      %p135 = por %p133, %p134
      %s136 = ssub.s32 %s18, %s25
      %p137 = scmp.eq.s32.totalorder %s136, 0
      %s139 = sadd.s32 %s138, 1
      %s140 = scalar_select %p137, %s138, %s139
      %p143 = pneg %p137
      %p144 = scmp.eq.s32.totalorder %s18, 1
      %p145 = por %p143, %p144
      %p146 = scmp.ne.s32.totalorder %s138, %s141
      %p147 = scmp.eq.s32.totalorder %s18, 0
      %p148 = por %p146, %p147
      %p149 = scmp.ne.s32.totalorder %s138, %s141
      %p150 = scmp.eq.s32.totalorder %s23, 1
      %p151 = por %p149, %p150
      %p152 = scmp.ne.s32.totalorder %s141, %s142
      %p153 = scmp.eq.s32.totalorder %s23, 0
      %p154 = por %p152, %p153
      %p155 = scmp.ne.s32.totalorder %s141, %s142
      %p156 = scmp.eq.s32.totalorder %s24, 1
      %p157 = por %p155, %p156
      %p159 = scmp.ne.s32.totalorder %s142, %s158
      %p160 = scmp.eq.s32.totalorder %s24, 0
      %p161 = por %p159, %p160
      %p162 = scmp.le.s32.totalorder 1, %s18
      %p163 = scmp.lt.s32.totalorder %s18, 3
      %p164 = pnand %p162, %p163
      %p165 = pneg %p164
      // Predicated region
      $region9: #{tpu_custom_call.1} parent=5 // pred_check
        _
      $region10: #{tpu_custom_call.1} parent=5 // pred_check_branch
        %167 = sbr.rel (%p164) target = $region12
      $region11: #{tpu_custom_call.1} parent=5 // pred_region
        %s168 = ssub.s32 %s18, 1
        // Predicated region
        $region13: #{tpu_custom_call.1} parent=11 // pred_check
          %p169 = pneg %p65
        $region14: #{tpu_custom_call.1} parent=11 // pred_check_branch
          %171 = sbr.rel (%p169) target = $region16
        $region15: #{tpu_custom_call.1} parent=11 // pred_region
          %s173 = ssub.s32 1024, 1024
          %174 = vsyncadd [#allocation6], %s173
          %s175 = sshll.u32 [#allocation5], 4
          %s176 = int_to_ptr.vmem [resolvable:$true] %s175
          %181 = dma.hbm_to_vmem [thread:$0]  %s1, 1024, %s176, [#allocation6], 128, 128, 8
        $region16: #{tpu_custom_call.1} parent=11 // pred_fallthru
          _
        // Predicated region
        $region17: #{tpu_custom_call.1} parent=11 // pred_check
          %p182 = pneg %p86
        $region18: #{tpu_custom_call.1} parent=11 // pred_check_branch
          %184 = sbr.rel (%p182) target = $region20
        $region19: #{tpu_custom_call.1} parent=11 // pred_region
          _
        $region20: #{tpu_custom_call.1} parent=11 // pred_fallthru
          _
        // Predicated region
        $region21: #{tpu_custom_call.1} parent=11 // pred_check
          %p185 = pneg %p107
        $region22: #{tpu_custom_call.1} parent=11 // pred_check_branch
          %187 = sbr.rel (%p185) target = $region24
        $region23: #{tpu_custom_call.1} parent=11 // pred_region
          %s189 = ssub.s32 512, 512
          %190 = vsyncadd [#allocation6], %s189
          %s191 = sshll.u32 [#allocation7], 4
          %s192 = int_to_ptr.vmem [resolvable:$true] %s191
          %197 = dma.hbm_to_vmem [thread:$0]  %s3, 512, %s192, [#allocation6], 64, 64, 4
        $region24: #{tpu_custom_call.1} parent=11 // pred_fallthru
          _
        // Predicated region
        $region25: #{tpu_custom_call.1} parent=11 // pred_check
          %p198 = pneg %p128
        $region26: #{tpu_custom_call.1} parent=11 // pred_check_branch
          %200 = sbr.rel (%p198) target = $region28
        $region27: #{tpu_custom_call.1} parent=11 // pred_region
          _
        $region28: #{tpu_custom_call.1} parent=11 // pred_fallthru
          _
      $region12: #{tpu_custom_call.1} parent=5 // pred_fallthru
        _
      %p201 = scmp.lt.s32.totalorder %s18, 2
      // Predicated region
      $region29: #{tpu_custom_call.1} parent=5 // pred_check
        %p202 = pneg %p201
      $region30: #{tpu_custom_call.1} parent=5 // pred_check_branch
        %204 = sbr.rel (%p202) target = $region32
      $region31: #{tpu_custom_call.1} parent=5 // pred_region
        // Predicated region
        $region33: #{tpu_custom_call.1} parent=31 // pred_check
          %p205 = pneg %p38
        $region34: #{tpu_custom_call.1} parent=31 // pred_check_branch
          %207 = sbr.rel (%p205) target = $region36
        $region35: #{tpu_custom_call.1} parent=31 // pred_region
          %s208 = sand.u32 %s28, 1
          %s209 = scalar_lea.sflag [#allocation3], %s208
          %s210 = sand.u32 %s28, 1
          %s211 = smul.addr %s210, 8
          %s212 = scalar_lea.vmem [#allocation2], %s211
          %s214 = ssub.s32 128, 128
          %215 = vsyncadd %s209, %s214
          %s216 = smul.addr %s18, 128
          %s217 = scalar_lea.hbm %s0, %s216
          %s219 = sshll.u32 %s212, 4
          %s220 = int_to_ptr.vmem [resolvable:$true] %s219
          %222 = dma.hbm_to_vmem [thread:$0]  %s217, 128, %s220, %s209
        $region36: #{tpu_custom_call.1} parent=31 // pred_fallthru
          _
      $region32: #{tpu_custom_call.1} parent=5 // pred_fallthru
        _
      %p223 = scmp.le.s32.totalorder 1, %s18
      %p224 = scmp.lt.s32.totalorder %s18, 3
      %p225 = pnand %p223, %p224
      %p226 = pneg %p225
      // Predicated region
      $region37: #{tpu_custom_call.1} parent=5 // pred_check
        _
      $region38: #{tpu_custom_call.1} parent=5 // pred_check_branch
        %228 = sbr.rel (%p225) target = $region40
      $region39: #{tpu_custom_call.1} parent=5 // pred_region
        %s229 = ssub.s32 %s18, 1
        %s230 = sand.u32 %s31, 1
        %s231 = scalar_lea.sflag [#allocation3], %s230
        %s232 = sand.u32 %s31, 1
        %s233 = smul.addr %s232, 8
        %s234 = scalar_lea.vmem [#allocation2], %s233
        // Predicated region
        $region41: #{tpu_custom_call.1} parent=39 // pred_check
          %p235 = pneg %p44
        $region42: #{tpu_custom_call.1} parent=39 // pred_check_branch
          %237 = sbr.rel (%p235) target = $region44
        $region43: #{tpu_custom_call.1} parent=39 // pred_region
          %238 = dma.done %s231, 128
        $region44: #{tpu_custom_call.1} parent=39 // pred_fallthru
          _
        // Predicated region
        $region45: #{tpu_custom_call.1} parent=39 // pred_check
          %p239 = pneg %p65
        $region46: #{tpu_custom_call.1} parent=39 // pred_check_branch
          %241 = sbr.rel (%p239) target = $region48
        $region47: #{tpu_custom_call.1} parent=39 // pred_region
          %242 = dma.done [#allocation6], 1024
        $region48: #{tpu_custom_call.1} parent=39 // pred_fallthru
          _
        // Predicated region
        $region49: #{tpu_custom_call.1} parent=39 // pred_check
          %p243 = pneg %p107
        $region50: #{tpu_custom_call.1} parent=39 // pred_check_branch
          %245 = sbr.rel (%p243) target = $region52
        $region51: #{tpu_custom_call.1} parent=39 // pred_region
          %246 = dma.done [#allocation6], 512
        $region52: #{tpu_custom_call.1} parent=39 // pred_fallthru
          _
        %s247 = sand.u32 %s31, 1
        %s248 = scalar_lea.sflag [#allocation3], %s247
        %s249 = sand.u32 %s31, 1
        %s250 = smul.addr %s249, 8
        %s251 = scalar_lea.vmem [#allocation2], %s250
        %p252 = pneg %p44
        %p253 = pneg %p41
        %p254 = pneg %p65
        %p255 = pneg %p62
        %p256 = pneg %p86
        %p257 = pneg %p83
        %p258 = pneg %p107
        %p259 = pneg %p104
        %p260 = pneg %p128
        %p261 = pneg %p125
        %p262 = pneg %p154
        %p263 = pneg %p151
        %s264 = sand.u32 %s141, 1
        %s265 = scalar_lea.sflag [#allocation4], %s264
        %s266 = sand.u32 %s141, 1
        %s267 = smul.addr %s266, 8
        %s268 = scalar_lea.vmem [#allocation8], %s267
        %v270 = vld [vmem:[%s234] sm:$0xff]
        %v271 = vpack.c.bf16 %v270, %v270
        %v272 = vld [vmem:[#allocation5] sm:$0xff]
        %v273 = vld [vmem:[#allocation5 + $0x8] sm:$0xff]
        %v274 = vld [vmem:[#allocation5 + $0x10] sm:$0xff]
        %v275 = vld [vmem:[#allocation5 + $0x18] sm:$0xff]
        %v276 = vld [vmem:[#allocation5 + $0x20] sm:$0xff]
        %v277 = vld [vmem:[#allocation5 + $0x28] sm:$0xff]
        %v278 = vld [vmem:[#allocation5 + $0x30] sm:$0xff]
        %v279 = vld [vmem:[#allocation5 + $0x38] sm:$0xff]
        %v280 = vld [vmem:[%s2] sm:$0x3]
        %v282 = vlaneseq
        %v283 = vshrl.u32 %v282, 7
        %v284 = vsub.s32 0, %v283
        %v285 = vrot.slane %v280, %v284
        %v286 = vlaneseq
        %v287 = vshrl.u32 %v286, 7
        %v288 = vsub.s32 1, %v287
        %v289 = vrot.slane %v280, %v288
        %v300 = vunpack.c.l.b16 %v272
        %v301 = vunpack.c.h.b16 %v272
        %v302 = vunpack.c.l.b16 %v273
        %v303 = vunpack.c.h.b16 %v273
        %v304 = vunpack.c.l.b16 %v274
        %v305 = vunpack.c.h.b16 %v274
        %v306 = vunpack.c.l.b16 %v275
        %v307 = vunpack.c.h.b16 %v275
        %v308 = vunpack.c.l.b16 %v276
        %v309 = vunpack.c.h.b16 %v276
        %v310 = vunpack.c.l.b16 %v277
        %v311 = vunpack.c.h.b16 %v277
        %v312 = vunpack.c.l.b16 %v278
        %v313 = vunpack.c.h.b16 %v278
        %v314 = vunpack.c.l.b16 %v279
        %v315 = vunpack.c.h.b16 %v279
        %v316 = vpack.c.b16 %v302, %v300
        %v317 = vpack.c.b16 %v303, %v301
        %v318 = vpack.c.b16 %v306, %v304
        %v319 = vpack.c.b16 %v307, %v305
        %v320 = vpack.c.b16 %v310, %v308
        %v321 = vpack.c.b16 %v311, %v309
        %v322 = vpack.c.b16 %v314, %v312
        %v323 = vpack.c.b16 %v315, %v313
        %vm332 = vcmask 523264
        %v334 = vsel %vm332, %v271, 0
        %336 = vmatprep.subr.bf16.mxu0 %v317
        %337 = vmatpush1.bf16.msra.mxu0 %v316
        %338 = vmatprep.subr.bf16.mxu0 %v319
        %339 = vmatpush1.bf16.msra.mxu0 %v318
        %340 = vmatprep.subr.bf16.mxu0 %v321
        %341 = vmatpush1.bf16.msra.mxu0 %v320
        %342 = vmatprep.subr.bf16.mxu0 %v323
        %343 = vmatpush1.bf16.msra.mxu0 %v322
        %344 = vmatprep.subr.bf16.mxu0 0
        %345 = vmatpush1.bf16.msra.mxu0 0
        %346 = vmatprep.subr.bf16.mxu0 0
        %347 = vmatpush1.bf16.msra.mxu0 0
        %348 = vmatprep.subr.bf16.mxu0 0
        %349 = vmatpush1.bf16.msra.mxu0 0
        %350 = vmatprep.subr.bf16.mxu0 0
        %351 = vmatpush1.bf16.msra.mxu0 0
        %352 = vmatprep.subr.bf16.mxu0 0
        %353 = vmatpush1.bf16.msra.mxu0 0
        %354 = vmatprep.subr.bf16.mxu0 0
        %355 = vmatpush1.bf16.msra.mxu0 0
        %356 = vmatprep.subr.bf16.mxu0 0
        %357 = vmatpush1.bf16.msra.mxu0 0
        %358 = vmatprep.subr.bf16.mxu0 0
        %359 = vmatpush1.bf16.msra.mxu0 0
        %360 = vmatprep.subr.bf16.mxu0 0
        %361 = vmatpush1.bf16.msra.mxu0 0
        %362 = vmatprep.subr.bf16.mxu0 0
        %363 = vmatpush1.bf16.msra.mxu0 0
        %364 = vmatprep.subr.bf16.mxu0 0
        %365 = vmatpush1.bf16.msra.mxu0 0
        %366 = vmatprep.subr.bf16.mxu0 0
        %367 = vmatpush1.bf16.msra.mxu0 0
        %368 = vmatprep.mubr.bf16.mxu0 0
        %369 = vmatmul.mubr.bf16.gmra.mrb[0].mxu0 %v334
        %v370 = vpop.f32.mrb[0].mxu0
        %v371 = vadd.f32 %v285, %v370
        %v372 = vpop.f32.mrb[0].mxu0
        %v373 = vadd.f32 %v289, %v372
        %v374 = vpop.f32.mrb[0].mxu0
        %v375 = vpop.f32.mrb[0].mxu0
        %376 = vdwg.mxu0
        %v377 = vpack.c.bf16 %v371, %v371
        %v378 = vpack.c.bf16 %v373, %v373
        %380 = vrot.lane.b32.xlu0 %v377, 112
        %v381 = vpop.permute.xlu0 %380
        %382 = vrot.lane.b32.xlu0 %v377, 96
        %v383 = vpop.permute.xlu0 %382
        %384 = vrot.lane.b32.xlu0 %v377, 80
        %v385 = vpop.permute.xlu0 %384
        %387 = vrot.lane.b32.xlu0 %v378, 112
        %v388 = vpop.permute.xlu0 %387
        %389 = vrot.lane.b32.xlu0 %v378, 96
        %v390 = vpop.permute.xlu0 %389
        %391 = vrot.lane.b32.xlu0 %v378, 80
        %v392 = vpop.permute.xlu0 %391
        %393 = vrot.lane.b32.xlu0 %v377, 64
        %v394 = vpop.permute.xlu0 %393
        %vm395 = vcmask 130048
        %v397 = vsel %vm395, %v377, 0
        %v400 = vsel %vm395, %v394, 0
        %402 = vmatprep.subr.bf16.mxu0 0
        %403 = vmatpush1.bf16.xpose.msra.mxu0 %v400
        %404 = vmatprep.subr.bf16.mxu0 0
        %405 = vmatpush1.bf16.xpose.msra.mxu0 0
        %406 = vmatprep.subr.bf16.mxu0 0
        %407 = vmatpush1.bf16.xpose.msra.mxu0 0
        %408 = vmatprep.subr.bf16.mxu0 0
        %409 = vmatpush1.bf16.xpose.msra.mxu0 0
        %410 = vmatprep.subr.bf16.mxu0 0
        %411 = vmatpush1.bf16.xpose.msra.mxu0 0
        %412 = vmatprep.subr.bf16.mxu0 0
        %413 = vmatpush1.bf16.xpose.msra.mxu0 0
        %414 = vmatprep.subr.bf16.mxu0 0
        %415 = vmatpush1.bf16.xpose.msra.mxu0 0
        %416 = vmatprep.subr.bf16.mxu0 0
        %417 = vmatpush1.bf16.xpose.msra.mxu0 0
        %418 = vmatprep.subr.bf16.mxu0 0
        %419 = vmatpush1.bf16.xpose.msra.mxu0 0
        %420 = vmatprep.subr.bf16.mxu0 0
        %421 = vmatpush1.bf16.xpose.msra.mxu0 0
        %422 = vmatprep.subr.bf16.mxu0 0
        %423 = vmatpush1.bf16.xpose.msra.mxu0 0
        %424 = vmatprep.subr.bf16.mxu0 0
        %425 = vmatpush1.bf16.xpose.msra.mxu0 0
        %426 = vmatprep.subr.bf16.mxu0 0
        %427 = vmatpush1.bf16.xpose.msra.mxu0 0
        %428 = vmatprep.subr.bf16.mxu0 0
        %429 = vmatpush1.bf16.xpose.msra.mxu0 0
        %430 = vmatprep.subr.bf16.mxu0 0
        %431 = vmatpush1.bf16.xpose.msra.mxu0 0
        %432 = vmatprep.subr.bf16.mxu0 0
        %433 = vmatpush1.bf16.xpose.msra.mxu0 0
        %434 = vmatprep.mubr.bf16.mxu0 0
        %435 = vmatmul.mubr.bf16.gmra.mrb[0].mxu0 %v397
        %v436 = vpop.f32.mrb[0].mxu0
        %v437 = vadd.f32 0.0, %v436
        %v438 = vpop.f32.mrb[0].mxu0
        %v439 = vpop.f32.mrb[0].mxu0
        %v440 = vpop.f32.mrb[0].mxu0
        %441 = vdwg.mxu0
        %442 = vrot.lane.b32.xlu0 %v381, 64
        %v443 = vpop.permute.xlu0 %442
        %v445 = vsel %vm395, %v381, 0
        %v448 = vsel %vm395, %v443, 0
        %450 = vmatprep.subr.bf16.mxu0 0
        %451 = vmatpush1.bf16.xpose.msra.mxu0 %v448
        %452 = vmatprep.subr.bf16.mxu0 0
        %453 = vmatpush1.bf16.xpose.msra.mxu0 0
        %454 = vmatprep.subr.bf16.mxu0 0
        %455 = vmatpush1.bf16.xpose.msra.mxu0 0
        %456 = vmatprep.subr.bf16.mxu0 0
        %457 = vmatpush1.bf16.xpose.msra.mxu0 0
        %458 = vmatprep.subr.bf16.mxu0 0
        %459 = vmatpush1.bf16.xpose.msra.mxu0 0
        %460 = vmatprep.subr.bf16.mxu0 0
        %461 = vmatpush1.bf16.xpose.msra.mxu0 0
        %462 = vmatprep.subr.bf16.mxu0 0
        %463 = vmatpush1.bf16.xpose.msra.mxu0 0
        %464 = vmatprep.subr.bf16.mxu0 0
        %465 = vmatpush1.bf16.xpose.msra.mxu0 0
        %466 = vmatprep.subr.bf16.mxu0 0
        %467 = vmatpush1.bf16.xpose.msra.mxu0 0
        %468 = vmatprep.subr.bf16.mxu0 0
        %469 = vmatpush1.bf16.xpose.msra.mxu0 0
        %470 = vmatprep.subr.bf16.mxu0 0
        %471 = vmatpush1.bf16.xpose.msra.mxu0 0
        %472 = vmatprep.subr.bf16.mxu0 0
        %473 = vmatpush1.bf16.xpose.msra.mxu0 0
        %474 = vmatprep.subr.bf16.mxu0 0
        %475 = vmatpush1.bf16.xpose.msra.mxu0 0
        %476 = vmatprep.subr.bf16.mxu0 0
        %477 = vmatpush1.bf16.xpose.msra.mxu0 0
        %478 = vmatprep.subr.bf16.mxu0 0
        %479 = vmatpush1.bf16.xpose.msra.mxu0 0
        %480 = vmatprep.subr.bf16.mxu0 0
        %481 = vmatpush1.bf16.xpose.msra.mxu0 0
        %482 = vmatprep.mubr.bf16.mxu0 0
        %483 = vmatmul.mubr.bf16.gmra.mrb[0].mxu0 %v445
        %v484 = vpop.f32.mrb[0].mxu0
        %v485 = vadd.f32 0.0, %v484
        %v486 = vpop.f32.mrb[0].mxu0
        %v487 = vpop.f32.mrb[0].mxu0
        %v488 = vpop.f32.mrb[0].mxu0
        %489 = vdwg.mxu0
        %490 = vrot.lane.b32.xlu0 %v383, 64
        %v491 = vpop.permute.xlu0 %490
        %v493 = vsel %vm395, %v383, 0
        %v496 = vsel %vm395, %v491, 0
        %498 = vmatprep.subr.bf16.mxu0 0
        %499 = vmatpush1.bf16.xpose.msra.mxu0 %v496
        %500 = vmatprep.subr.bf16.mxu0 0
        %501 = vmatpush1.bf16.xpose.msra.mxu0 0
        %502 = vmatprep.subr.bf16.mxu0 0
        %503 = vmatpush1.bf16.xpose.msra.mxu0 0
        %504 = vmatprep.subr.bf16.mxu0 0
        %505 = vmatpush1.bf16.xpose.msra.mxu0 0
        %506 = vmatprep.subr.bf16.mxu0 0
        %507 = vmatpush1.bf16.xpose.msra.mxu0 0
        %508 = vmatprep.subr.bf16.mxu0 0
        %509 = vmatpush1.bf16.xpose.msra.mxu0 0
        %510 = vmatprep.subr.bf16.mxu0 0
        %511 = vmatpush1.bf16.xpose.msra.mxu0 0
        %512 = vmatprep.subr.bf16.mxu0 0
        %513 = vmatpush1.bf16.xpose.msra.mxu0 0
        %514 = vmatprep.subr.bf16.mxu0 0
        %515 = vmatpush1.bf16.xpose.msra.mxu0 0
        %516 = vmatprep.subr.bf16.mxu0 0
        %517 = vmatpush1.bf16.xpose.msra.mxu0 0
        %518 = vmatprep.subr.bf16.mxu0 0
        %519 = vmatpush1.bf16.xpose.msra.mxu0 0
        %520 = vmatprep.subr.bf16.mxu0 0
        %521 = vmatpush1.bf16.xpose.msra.mxu0 0
        %522 = vmatprep.subr.bf16.mxu0 0
        %523 = vmatpush1.bf16.xpose.msra.mxu0 0
        %524 = vmatprep.subr.bf16.mxu0 0
        %525 = vmatpush1.bf16.xpose.msra.mxu0 0
        %526 = vmatprep.subr.bf16.mxu0 0
        %527 = vmatpush1.bf16.xpose.msra.mxu0 0
        %528 = vmatprep.subr.bf16.mxu0 0
        %529 = vmatpush1.bf16.xpose.msra.mxu0 0
        %530 = vmatprep.mubr.bf16.mxu0 0
        %531 = vmatmul.mubr.bf16.gmra.mrb[0].mxu0 %v493
        %v532 = vpop.f32.mrb[0].mxu0
        %v533 = vadd.f32 0.0, %v532
        %v534 = vpop.f32.mrb[0].mxu0
        %v535 = vpop.f32.mrb[0].mxu0
        %v536 = vpop.f32.mrb[0].mxu0
        %537 = vdwg.mxu0
        %538 = vrot.lane.b32.xlu0 %v385, 64
        %v539 = vpop.permute.xlu0 %538
        %v541 = vsel %vm395, %v385, 0
        %v544 = vsel %vm395, %v539, 0
        %546 = vmatprep.subr.bf16.mxu0 0
        %547 = vmatpush1.bf16.xpose.msra.mxu0 %v544
        %548 = vmatprep.subr.bf16.mxu0 0
        %549 = vmatpush1.bf16.xpose.msra.mxu0 0
        %550 = vmatprep.subr.bf16.mxu0 0
        %551 = vmatpush1.bf16.xpose.msra.mxu0 0
        %552 = vmatprep.subr.bf16.mxu0 0
        %553 = vmatpush1.bf16.xpose.msra.mxu0 0
        %554 = vmatprep.subr.bf16.mxu0 0
        %555 = vmatpush1.bf16.xpose.msra.mxu0 0
        %556 = vmatprep.subr.bf16.mxu0 0
        %557 = vmatpush1.bf16.xpose.msra.mxu0 0
        %558 = vmatprep.subr.bf16.mxu0 0
        %559 = vmatpush1.bf16.xpose.msra.mxu0 0
        %560 = vmatprep.subr.bf16.mxu0 0
        %561 = vmatpush1.bf16.xpose.msra.mxu0 0
        %562 = vmatprep.subr.bf16.mxu0 0
        %563 = vmatpush1.bf16.xpose.msra.mxu0 0
        %564 = vmatprep.subr.bf16.mxu0 0
        %565 = vmatpush1.bf16.xpose.msra.mxu0 0
        %566 = vmatprep.subr.bf16.mxu0 0
        %567 = vmatpush1.bf16.xpose.msra.mxu0 0
        %568 = vmatprep.subr.bf16.mxu0 0
        %569 = vmatpush1.bf16.xpose.msra.mxu0 0
        %570 = vmatprep.subr.bf16.mxu0 0
        %571 = vmatpush1.bf16.xpose.msra.mxu0 0
        %572 = vmatprep.subr.bf16.mxu0 0
        %573 = vmatpush1.bf16.xpose.msra.mxu0 0
        %574 = vmatprep.subr.bf16.mxu0 0
        %575 = vmatpush1.bf16.xpose.msra.mxu0 0
        %576 = vmatprep.subr.bf16.mxu0 0
        %577 = vmatpush1.bf16.xpose.msra.mxu0 0
        %578 = vmatprep.mubr.bf16.mxu0 0
        %579 = vmatmul.mubr.bf16.gmra.mrb[0].mxu0 %v541
        %v580 = vpop.f32.mrb[0].mxu0
        %v581 = vadd.f32 0.0, %v580
        %v582 = vpop.f32.mrb[0].mxu0
        %v583 = vpop.f32.mrb[0].mxu0
        %v584 = vpop.f32.mrb[0].mxu0
        %585 = vdwg.mxu0
        %vm586 = vcmask 64512
        %v587 = vsel %vm586, %v437, -inf
        %588 = vmax.xlane.f32.xlu0 %v587
        %v589 = vpop.xlane.xlu0 %588
        %v590 = vsel %vm586, %v485, -inf
        %591 = vmax.xlane.f32.xlu0 %v590
        %v592 = vpop.xlane.xlu0 %591
        %v593 = vsel %vm586, %v533, -inf
        %594 = vmax.xlane.f32.xlu0 %v593
        %v595 = vpop.xlane.xlu0 %594
        %v596 = vsel %vm586, %v581, -inf
        %597 = vmax.xlane.f32.xlu0 %v596
        %v598 = vpop.xlane.xlu0 %597
        %v599 = vsub.f32 %v437, %v589
        %v600 = vsub.f32 %v485, %v592
        %v601 = vsub.f32 %v533, %v595
        %v602 = vsub.f32 %v581, %v598
        %v603 = vmul.f32 %v599, 1.442695
        %v604 = vpow.pop %v603
        %v605 = vmul.f32 %v600, 1.442695
        %v606 = vpow.pop %v605
        %v607 = vmul.f32 %v601, 1.442695
        %v608 = vpow.pop %v607
        %v609 = vmul.f32 %v602, 1.442695
        %v610 = vpow.pop %v609
        %v611 = vsel %vm586, %v604, 0.0
        %612 = vadd.xlane.f32.xlu0 %v611
        %v613 = vpop.xlane.xlu0 %612
        %v614 = vsel %vm586, %v606, 0.0
        %615 = vadd.xlane.f32.xlu0 %v614
        %v616 = vpop.xlane.xlu0 %615
        %v617 = vsel %vm586, %v608, 0.0
        %618 = vadd.xlane.f32.xlu0 %v617
        %v619 = vpop.xlane.xlu0 %618
        %v620 = vsel %vm586, %v610, 0.0
        %621 = vadd.xlane.f32.xlu0 %v620
        %v622 = vpop.xlane.xlu0 %621
        %v623 = vrcp.pop %v613
        %v624 = vrcp.pop %v616
        %v625 = vrcp.pop %v619
        %v626 = vrcp.pop %v622
        %v627 = vmul.f32 %v604, %v623
        %v628 = vmul.f32 %v606, %v624
        %v629 = vmul.f32 %v608, %v625
        %v630 = vmul.f32 %v610, %v626
        %v631 = vpack.c.bf16 %v627, %v627
        %v632 = vpack.c.bf16 %v628, %v628
        %v633 = vpack.c.bf16 %v629, %v629
        %v634 = vpack.c.bf16 %v630, %v630
        %v636 = vsel %vm586, %v631, 0
        %vm638 = vcmask 1043456
        %v640 = vsel %vm638, %v378, 0
        %642 = vmatprep.subr.bf16.mxu0 0
        %643 = vmatpush1.bf16.msra.mxu0 %v640
        %644 = vmatprep.subr.bf16.mxu0 0
        %645 = vmatpush1.bf16.msra.mxu0 0
        %646 = vmatprep.subr.bf16.mxu0 0
        %647 = vmatpush1.bf16.msra.mxu0 0
        %648 = vmatprep.subr.bf16.mxu0 0
        %649 = vmatpush1.bf16.msra.mxu0 0
        %650 = vmatprep.subr.bf16.mxu0 0
        %651 = vmatpush1.bf16.msra.mxu0 0
        %652 = vmatprep.subr.bf16.mxu0 0
        %653 = vmatpush1.bf16.msra.mxu0 0
        %654 = vmatprep.subr.bf16.mxu0 0
        %655 = vmatpush1.bf16.msra.mxu0 0
        %656 = vmatprep.subr.bf16.mxu0 0
        %657 = vmatpush1.bf16.msra.mxu0 0
        %658 = vmatprep.subr.bf16.mxu0 0
        %659 = vmatpush1.bf16.msra.mxu0 0
        %660 = vmatprep.subr.bf16.mxu0 0
        %661 = vmatpush1.bf16.msra.mxu0 0
        %662 = vmatprep.subr.bf16.mxu0 0
        %663 = vmatpush1.bf16.msra.mxu0 0
        %664 = vmatprep.subr.bf16.mxu0 0
        %665 = vmatpush1.bf16.msra.mxu0 0
        %666 = vmatprep.subr.bf16.mxu0 0
        %667 = vmatpush1.bf16.msra.mxu0 0
        %668 = vmatprep.subr.bf16.mxu0 0
        %669 = vmatpush1.bf16.msra.mxu0 0
        %670 = vmatprep.subr.bf16.mxu0 0
        %671 = vmatpush1.bf16.msra.mxu0 0
        %672 = vmatprep.subr.bf16.mxu0 0
        %673 = vmatpush1.bf16.msra.mxu0 0
        %674 = vmatprep.mubr.bf16.mxu0 0
        %675 = vmatmul.mubr.bf16.gmra.mrb[0].mxu0 %v636
        %v676 = vpop.f32.mrb[0].mxu0
        %v677 = vadd.f32 0.0, %v676
        %v678 = vpop.f32.mrb[0].mxu0
        %v679 = vpop.f32.mrb[0].mxu0
        %v680 = vpop.f32.mrb[0].mxu0
        %681 = vdwg.mxu0
        %v683 = vsel %vm586, %v632, 0
        %v686 = vsel %vm638, %v388, 0
        %688 = vmatprep.subr.bf16.mxu0 0
        %689 = vmatpush1.bf16.msra.mxu0 %v686
        %690 = vmatprep.subr.bf16.mxu0 0
        %691 = vmatpush1.bf16.msra.mxu0 0
        %692 = vmatprep.subr.bf16.mxu0 0
        %693 = vmatpush1.bf16.msra.mxu0 0
        %694 = vmatprep.subr.bf16.mxu0 0
        %695 = vmatpush1.bf16.msra.mxu0 0
        %696 = vmatprep.subr.bf16.mxu0 0
        %697 = vmatpush1.bf16.msra.mxu0 0
        %698 = vmatprep.subr.bf16.mxu0 0
        %699 = vmatpush1.bf16.msra.mxu0 0
        %700 = vmatprep.subr.bf16.mxu0 0
        %701 = vmatpush1.bf16.msra.mxu0 0
        %702 = vmatprep.subr.bf16.mxu0 0
        %703 = vmatpush1.bf16.msra.mxu0 0
        %704 = vmatprep.subr.bf16.mxu0 0
        %705 = vmatpush1.bf16.msra.mxu0 0
        %706 = vmatprep.subr.bf16.mxu0 0
        %707 = vmatpush1.bf16.msra.mxu0 0
        %708 = vmatprep.subr.bf16.mxu0 0
        %709 = vmatpush1.bf16.msra.mxu0 0
        %710 = vmatprep.subr.bf16.mxu0 0
        %711 = vmatpush1.bf16.msra.mxu0 0
        %712 = vmatprep.subr.bf16.mxu0 0
        %713 = vmatpush1.bf16.msra.mxu0 0
        %714 = vmatprep.subr.bf16.mxu0 0
        %715 = vmatpush1.bf16.msra.mxu0 0
        %716 = vmatprep.subr.bf16.mxu0 0
        %717 = vmatpush1.bf16.msra.mxu0 0
        %718 = vmatprep.subr.bf16.mxu0 0
        %719 = vmatpush1.bf16.msra.mxu0 0
        %720 = vmatprep.mubr.bf16.mxu0 0
        %721 = vmatmul.mubr.bf16.gmra.mrb[0].mxu0 %v683
        %v722 = vpop.f32.mrb[0].mxu0
        %v723 = vadd.f32 0.0, %v722
        %v724 = vpop.f32.mrb[0].mxu0
        %v725 = vpop.f32.mrb[0].mxu0
        %v726 = vpop.f32.mrb[0].mxu0
        %727 = vdwg.mxu0
        %v729 = vsel %vm586, %v633, 0
        %v732 = vsel %vm638, %v390, 0
        %734 = vmatprep.subr.bf16.mxu0 0
        %735 = vmatpush1.bf16.msra.mxu0 %v732
        %736 = vmatprep.subr.bf16.mxu0 0
        %737 = vmatpush1.bf16.msra.mxu0 0
        %738 = vmatprep.subr.bf16.mxu0 0
        %739 = vmatpush1.bf16.msra.mxu0 0
        %740 = vmatprep.subr.bf16.mxu0 0
        %741 = vmatpush1.bf16.msra.mxu0 0
        %742 = vmatprep.subr.bf16.mxu0 0
        %743 = vmatpush1.bf16.msra.mxu0 0
        %744 = vmatprep.subr.bf16.mxu0 0
        %745 = vmatpush1.bf16.msra.mxu0 0
        %746 = vmatprep.subr.bf16.mxu0 0
        %747 = vmatpush1.bf16.msra.mxu0 0
        %748 = vmatprep.subr.bf16.mxu0 0
        %749 = vmatpush1.bf16.msra.mxu0 0
        %750 = vmatprep.subr.bf16.mxu0 0
        %751 = vmatpush1.bf16.msra.mxu0 0
        %752 = vmatprep.subr.bf16.mxu0 0
        %753 = vmatpush1.bf16.msra.mxu0 0
        %754 = vmatprep.subr.bf16.mxu0 0
        %755 = vmatpush1.bf16.msra.mxu0 0
        %756 = vmatprep.subr.bf16.mxu0 0
        %757 = vmatpush1.bf16.msra.mxu0 0
        %758 = vmatprep.subr.bf16.mxu0 0
        %759 = vmatpush1.bf16.msra.mxu0 0
        %760 = vmatprep.subr.bf16.mxu0 0
        %761 = vmatpush1.bf16.msra.mxu0 0
        %762 = vmatprep.subr.bf16.mxu0 0
        %763 = vmatpush1.bf16.msra.mxu0 0
        %764 = vmatprep.subr.bf16.mxu0 0
        %765 = vmatpush1.bf16.msra.mxu0 0
        %766 = vmatprep.mubr.bf16.mxu0 0
        %767 = vmatmul.mubr.bf16.gmra.mrb[0].mxu0 %v729
        %v768 = vpop.f32.mrb[0].mxu0
        %v769 = vadd.f32 0.0, %v768
        %v770 = vpop.f32.mrb[0].mxu0
        %v771 = vpop.f32.mrb[0].mxu0
        %v772 = vpop.f32.mrb[0].mxu0
        %773 = vdwg.mxu0
        %v775 = vsel %vm586, %v634, 0
        %v778 = vsel %vm638, %v392, 0
        %780 = vmatprep.subr.bf16.mxu0 0
        %781 = vmatpush1.bf16.msra.mxu0 %v778
        %782 = vmatprep.subr.bf16.mxu0 0
        %783 = vmatpush1.bf16.msra.mxu0 0
        %784 = vmatprep.subr.bf16.mxu0 0
        %785 = vmatpush1.bf16.msra.mxu0 0
        %786 = vmatprep.subr.bf16.mxu0 0
        %787 = vmatpush1.bf16.msra.mxu0 0
        %788 = vmatprep.subr.bf16.mxu0 0
        %789 = vmatpush1.bf16.msra.mxu0 0
        %790 = vmatprep.subr.bf16.mxu0 0
        %791 = vmatpush1.bf16.msra.mxu0 0
        %792 = vmatprep.subr.bf16.mxu0 0
        %793 = vmatpush1.bf16.msra.mxu0 0
        %794 = vmatprep.subr.bf16.mxu0 0
        %795 = vmatpush1.bf16.msra.mxu0 0
        %796 = vmatprep.subr.bf16.mxu0 0
        %797 = vmatpush1.bf16.msra.mxu0 0
        %798 = vmatprep.subr.bf16.mxu0 0
        %799 = vmatpush1.bf16.msra.mxu0 0
        %800 = vmatprep.subr.bf16.mxu0 0
        %801 = vmatpush1.bf16.msra.mxu0 0
        %802 = vmatprep.subr.bf16.mxu0 0
        %803 = vmatpush1.bf16.msra.mxu0 0
        %804 = vmatprep.subr.bf16.mxu0 0
        %805 = vmatpush1.bf16.msra.mxu0 0
        %806 = vmatprep.subr.bf16.mxu0 0
        %807 = vmatpush1.bf16.msra.mxu0 0
        %808 = vmatprep.subr.bf16.mxu0 0
        %809 = vmatpush1.bf16.msra.mxu0 0
        %810 = vmatprep.subr.bf16.mxu0 0
        %811 = vmatpush1.bf16.msra.mxu0 0
        %812 = vmatprep.mubr.bf16.mxu0 0
        %813 = vmatmul.mubr.bf16.gmra.mrb[0].mxu0 %v775
        %v814 = vpop.f32.mrb[0].mxu0
        %v815 = vadd.f32 0.0, %v814
        %v816 = vpop.f32.mrb[0].mxu0
        %v817 = vpop.f32.mrb[0].mxu0
        %v818 = vpop.f32.mrb[0].mxu0
        %819 = vdwg.mxu0
        %821 = vrot.lane.b32.xlu0 %v723, 16
        %v822 = vpop.permute.xlu0 %821
        %825 = vrot.lane.b32.xlu0 %v769, 32
        %v826 = vpop.permute.xlu0 %825
        %829 = vrot.lane.b32.xlu0 %v815, 48
        %v830 = vpop.permute.xlu0 %829
        %v832 = vsel %vm395, %v677, %v822
        %vm833 = vcmask 261120
        %v834 = vsel %vm833, %v832, %v826
        %vm835 = vcmask 392192
        %v836 = vsel %vm835, %v834, %v830
        %v837 = vpack.c.bf16 %v836, %v836
        %v838 = vld [vmem:[#allocation7] sm:$0xf]
        %v839 = vld [vmem:[#allocation7 + $0x4] sm:$0xf]
        %v840 = vld [vmem:[#allocation7 + $0x8] sm:$0xf]
        %v841 = vld [vmem:[#allocation7 + $0xc] sm:$0xf]
        %v842 = vld [vmem:[#allocation7 + $0x10] sm:$0xf]
        %v843 = vld [vmem:[#allocation7 + $0x14] sm:$0xf]
        %v844 = vld [vmem:[#allocation7 + $0x18] sm:$0xf]
        %v845 = vld [vmem:[#allocation7 + $0x1c] sm:$0xf]
        %v846 = vld [vmem:[%s4] sm:$0x1]
        %v848 = vlaneseq
        %v849 = vshrl.u32 %v848, 7
        %v850 = vsub.s32 0, %v849
        %v851 = vrot.slane %v846, %v850
        %v861 = vunpack.c.l.b16 %v838
        %v862 = vunpack.c.l.b16 %v839
        %v863 = vunpack.c.l.b16 %v840
        %v864 = vunpack.c.l.b16 %v841
        %v865 = vunpack.c.l.b16 %v842
        %v866 = vunpack.c.l.b16 %v843
        %v867 = vunpack.c.l.b16 %v844
        %v868 = vunpack.c.l.b16 %v845
        %v869 = vpack.c.b16 %v862, %v861
        %v870 = vpack.c.b16 %v864, %v863
        %v871 = vpack.c.b16 %v866, %v865
        %v872 = vpack.c.b16 %v868, %v867
        %v878 = vsel %vm332, %v837, 0
        %880 = vmatprep.subr.bf16.mxu0 0
        %881 = vmatpush1.bf16.msra.mxu0 %v869
        %882 = vmatprep.subr.bf16.mxu0 0
        %883 = vmatpush1.bf16.msra.mxu0 %v870
        %884 = vmatprep.subr.bf16.mxu0 0
        %885 = vmatpush1.bf16.msra.mxu0 %v871
        %886 = vmatprep.subr.bf16.mxu0 0
        %887 = vmatpush1.bf16.msra.mxu0 %v872
        %888 = vmatprep.subr.bf16.mxu0 0
        %889 = vmatpush1.bf16.msra.mxu0 0
        %890 = vmatprep.subr.bf16.mxu0 0
        %891 = vmatpush1.bf16.msra.mxu0 0
        %892 = vmatprep.subr.bf16.mxu0 0
        %893 = vmatpush1.bf16.msra.mxu0 0
        %894 = vmatprep.subr.bf16.mxu0 0
        %895 = vmatpush1.bf16.msra.mxu0 0
        %896 = vmatprep.subr.bf16.mxu0 0
        %897 = vmatpush1.bf16.msra.mxu0 0
        %898 = vmatprep.subr.bf16.mxu0 0
        %899 = vmatpush1.bf16.msra.mxu0 0
        %900 = vmatprep.subr.bf16.mxu0 0
        %901 = vmatpush1.bf16.msra.mxu0 0
        %902 = vmatprep.subr.bf16.mxu0 0
        %903 = vmatpush1.bf16.msra.mxu0 0
        %904 = vmatprep.subr.bf16.mxu0 0
        %905 = vmatpush1.bf16.msra.mxu0 0
        %906 = vmatprep.subr.bf16.mxu0 0
        %907 = vmatpush1.bf16.msra.mxu0 0
        %908 = vmatprep.subr.bf16.mxu0 0
        %909 = vmatpush1.bf16.msra.mxu0 0
        %910 = vmatprep.subr.bf16.mxu0 0
        %911 = vmatpush1.bf16.msra.mxu0 0
        %912 = vmatprep.mubr.bf16.mxu0 0
        %913 = vmatmul.mubr.bf16.gmra.mrb[0].mxu0 %v878
        %v914 = vpop.f32.mrb[0].mxu0
        %v915 = vadd.f32 %v851, %v914
        %v916 = vpop.f32.mrb[0].mxu0
        %v917 = vpop.f32.mrb[0].mxu0
        %v918 = vpop.f32.mrb[0].mxu0
        %919 = vdwg.mxu0
        %920 = vst.msk [vmem:[%s268] sm:$0xff] %vm332, %v915
        %s921 = sand.u32 %s141, 1
        %s922 = scalar_lea.sflag [#allocation4], %s921
        %s923 = sand.u32 %s141, 1
        %s924 = smul.addr %s923, 8
        %s925 = scalar_lea.vmem [#allocation8], %s924
        // Predicated region
        $region53: #{tpu_custom_call.1} parent=39 // pred_check
          %p926 = pneg %p151
        $region54: #{tpu_custom_call.1} parent=39 // pred_check_branch
          %928 = sbr.rel (%p926) target = $region56
        $region55: #{tpu_custom_call.1} parent=39 // pred_region
          %s930 = ssub.s32 128, 128
          %931 = vsyncadd %s922, %s930
          %s932 = smul.addr %s23, 128
          %s933 = scalar_lea.hbm %s5, %s932
          %s935 = sshll.u32 %s925, 4
          %s936 = int_to_ptr.vmem [resolvable:$true] %s935
          %938 = dma.vmem_to_hbm [thread:$0]  %s936, 128, %s933, %s922
        $region56: #{tpu_custom_call.1} parent=39 // pred_fallthru
          _
      $region40: #{tpu_custom_call.1} parent=5 // pred_fallthru
        _
      %p939 = scmp.le.s32.totalorder 2, %s18
      // Predicated region
      $region57: #{tpu_custom_call.1} parent=5 // pred_check
        %p940 = pneg %p939
      $region58: #{tpu_custom_call.1} parent=5 // pred_check_branch
        %942 = sbr.rel (%p940) target = $region60
      $region59: #{tpu_custom_call.1} parent=5 // pred_region
        %s943 = ssub.s32 %s18, 2
        // Predicated region
        $region61: #{tpu_custom_call.1} parent=59 // pred_check
          %p944 = pneg %p157
        $region62: #{tpu_custom_call.1} parent=59 // pred_check_branch
          %946 = sbr.rel (%p944) target = $region64
        $region63: #{tpu_custom_call.1} parent=59 // pred_region
          %s947 = sand.u32 %s142, 1
          %s948 = scalar_lea.sflag [#allocation4], %s947
          %s949 = sand.u32 %s142, 1
          %s950 = smul.addr %s949, 8
          %s951 = scalar_lea.vmem [#allocation8], %s950
          %952 = dma.done %s948, 128
        $region64: #{tpu_custom_call.1} parent=59 // pred_fallthru
          _
      $region60: #{tpu_custom_call.1} parent=5 // pred_fallthru
        _
    $region6: #{tpu_custom_call.1} parent=1 // loop_footer
      %s22 = sadd.s32 1, %s18
    $region7: #{tpu_custom_call.1} parent=1 // loop_footer_branch
      %17 = sbr.rel target = $region3
    $region8: #{tpu_custom_call.1} parent=1 // loop_exit
      _
    %953 = vsyncpa [#allocation3], 1
    %s954 = scalar_lea.sflag [#allocation3], 1
    %955 = vsyncpa %s954, 1
    %956 = vsyncpa [#allocation6], 1
    %957 = vsyncpa [#allocation4], 1
    %s958 = scalar_lea.sflag [#allocation4], 1
    %959 = vsyncpa %s958, 1

</llo_original>
